<compile_context>
chip_gen: v7x
topology: tpu7x:2x2x1
jax: 0.10.0
libtpu: 0.0.40
codegen_flags: <defaults>
</compile_context>

<pallas_src>
import jax
import jax.numpy as jnp
from jax.experimental import pallas as pl
from jax.experimental.pallas import tpu as pltpu


def _round_up(x: int, m: int) -> int:
    return -(-x // m) * m


def mlp_kernel(x_ref, w1_ref, b1_ref, w2_ref, b2_ref, w3_ref, b3_ref, o_ref):
    # Layer 1: Linear(F, H) + ReLU  (bf16/f32 operands, f32 accumulation on MXU)
    h1 = jnp.dot(x_ref[...], w1_ref[...], preferred_element_type=jnp.float32)
    h1 = jnp.maximum(h1 + b1_ref[...], 0.0)
    # Layer 2: Linear(H, H) + ReLU
    h2 = jnp.dot(h1.astype(w2_ref.dtype), w2_ref[...],
                 preferred_element_type=jnp.float32)
    h2 = jnp.maximum(h2 + b2_ref[...], 0.0)
    # Layer 3: Linear(H, A_pad)  (lane-dense padded output -> unmasked stores)
    out = jnp.dot(h2.astype(w3_ref.dtype), w3_ref[...],
                  preferred_element_type=jnp.float32)
    o_ref[...] = (out + b3_ref[...]).astype(o_ref.dtype)


def mlp_forward(x, params, *, tb=512, compute_dtype=jnp.bfloat16):
    """x: (B, ...) float32 (extra dims flattened, like nn.Flatten);
    params: dict of w1,b1,w2,b2,w3,b3 with weights shaped (in, out)."""
    w1, b1, w2, b2, w3, b3 = (
        params["w1"], params["b1"], params["w2"],
        params["b2"], params["w3"], params["b3"],
    )
    B = x.shape[0]
    x2 = x.reshape(B, -1)                       # nn.Flatten
    F = x2.shape[1]
    H = w1.shape[1]
    A = w3.shape[1]

    # --- lane-dense output: pad action dim to a multiple of 128 -------------
    A_pad = _round_up(A, 128)
    w3p = jnp.pad(w3, ((0, 0), (0, A_pad - A)))
    b3p = jnp.pad(b3, ((0, 0), (0, A_pad - A)))

    # --- MXU operands in compute_dtype (bf16 default), biases stay f32 ------
    xc = x2.astype(compute_dtype)
    w1c = w1.astype(compute_dtype)
    w2c = w2.astype(compute_dtype)
    w3c = w3p.astype(compute_dtype)

    # --- batch tiling --------------------------------------------------------
    if B <= tb:
        TB = B                                  # single full-extent block
        B_pad = B
    else:
        TB = tb                                 # tb must be a multiple of 8
        B_pad = _round_up(B, TB)
        if B_pad != B:
            xc = jnp.pad(xc, ((0, B_pad - B), (0, 0)))
    grid = (B_pad // TB,)

    itm = jnp.dtype(compute_dtype).itemsize
    cost = pl.CostEstimate(
        flops=2 * B_pad * (F * H + H * H + H * A_pad),
        transcendentals=0,
        bytes_accessed=(B_pad * F * itm
                        + (F * H + H * H + H * A_pad) * itm
                        + (H + H + A_pad) * 4
                        + B_pad * A_pad * 4),
    )

    const = lambda i: (0, 0)                    # VMEM-resident weights/biases
    out_pad = pl.pallas_call(
        mlp_kernel,
        out_shape=jax.ShapeDtypeStruct((B_pad, A_pad), jnp.float32),
        grid=grid,
        in_specs=[
            pl.BlockSpec((TB, F), lambda i: (i, 0)),
            pl.BlockSpec((F, H), const),
            pl.BlockSpec((1, H), const),
            pl.BlockSpec((H, H), const),
            pl.BlockSpec((1, H), const),
            pl.BlockSpec((H, A_pad), const),
            pl.BlockSpec((1, A_pad), const),
        ],
        out_specs=pl.BlockSpec((TB, A_pad), lambda i: (i, 0)),
        compiler_params=pltpu.CompilerParams(
            dimension_semantics=("parallel",),
        ),
        cost_estimate=cost,
    )(xc, w1c, b1, w2c, b2, w3c, b3p)

    # Slice padded rows / padded action columns back off (important before any
    # argmax over actions).
    return out_pad[:B, :A]


def init_params(key, input_dim, hidden, num_actions):
    """Deterministic init mimicking PyTorch Linear's U(-1/sqrt(fan_in), 1/sqrt(fan_in))."""
    def linear(k, fan_in, fan_out):
        kw, kb = jax.random.split(k)
        bound = 1.0 / jnp.sqrt(jnp.float32(fan_in))
        w = jax.random.uniform(kw, (fan_in, fan_out), jnp.float32, -bound, bound)
        b = jax.random.uniform(kb, (1, fan_out), jnp.float32, -bound, bound)
        return w, b

    k1, k2, k3 = jax.random.split(key, 3)
    w1, b1 = linear(k1, input_dim, hidden)
    w2, b2 = linear(k2, hidden, hidden)
    w3, b3 = linear(k3, hidden, num_actions)
    return {"w1": w1, "b1": b1, "w2": w2, "b2": b2, "w3": w3, "b3": b3}


def mlp_reference(x, p):
    x2 = x.reshape(x.shape[0], -1)
    h1 = jnp.maximum(x2 @ p["w1"] + p["b1"], 0.0)
    h2 = jnp.maximum(h1 @ p["w2"] + p["b2"], 0.0)
    return h2 @ p["w3"] + p["b3"]


if __name__ == "__main__":
    key = jax.random.PRNGKey(0)
    k_x, k_p, k_x2 = jax.random.split(key, 3)

    batch, input_dim, hidden, num_actions = 2, 8, 64, 4

    x = jax.random.normal(k_x, (batch, input_dim), dtype=jnp.float32)
    params = init_params(k_p, input_dim, hidden, num_actions)

    fwd = jax.jit(mlp_forward, static_argnames=("tb", "compute_dtype"))

    # 1) Tiny-batch path (single full-extent block), exact f32 compute.
    out_f32 = jax.block_until_ready(fwd(x, params, compute_dtype=jnp.float32))
    ref = mlp_reference(x, params)
    assert out_f32.shape == (batch, num_actions)
    assert jnp.allclose(out_f32, ref, atol=1e-5, rtol=1e-5), "f32 mismatch vs reference"

    # 2) Default bf16 MXU operands with f32 accumulation (looser tolerance).
    out_bf16 = jax.block_until_ready(fwd(x, params))
    assert jnp.allclose(out_bf16, ref, atol=5e-2, rtol=5e-2), "bf16 mismatch vs reference"

    # 3) Larger batch exercising the tiled path (grid over B, ragged tail padded).
    x_big = jax.random.normal(k_x2, (200, input_dim), dtype=jnp.float32)
    out_big = jax.block_until_ready(fwd(x_big, params, tb=128))
    ref_big = mlp_reference(x_big, params)
    assert out_big.shape == (200, num_actions)
    assert jnp.allclose(out_big, ref_big, atol=5e-2, rtol=5e-2), "tiled mismatch vs reference"

    print("KERNEL_OK")
</pallas_src>

<mosaic_0001>
module attributes {stable_mosaic.version = 11 : i64} {
  func.func @mlp_kernel(%arg0: i32, %arg1: memref<2x8xf32, #tpu.memory_space<vmem>>, %arg2: memref<8x64xf32, #tpu.memory_space<vmem>>, %arg3: memref<1x64xf32, #tpu.memory_space<vmem>>, %arg4: memref<64x64xf32, #tpu.memory_space<vmem>>, %arg5: memref<1x64xf32, #tpu.memory_space<vmem>>, %arg6: memref<64x128xf32, #tpu.memory_space<vmem>>, %arg7: memref<1x128xf32, #tpu.memory_space<vmem>>, %arg8: memref<2x128xf32, #tpu.memory_space<vmem>>) attributes {dimension_semantics = [#tpu.dimension_semantics<parallel>], iteration_bounds = array<i64: 1>, scalar_prefetch = 0 : i64, scratch_operands = 0 : i64, tpu.core_type = #tpu.core_type<tc>, window_params = [{transform_indices = @transform_0, window_bounds = array<i64: 2, 8>}, {pipeline_mode = #tpu.pipeline_mode<synchronous>, transform_indices = @transform_1, window_bounds = array<i64: 8, 64>}, {pipeline_mode = #tpu.pipeline_mode<synchronous>, transform_indices = @transform_2, window_bounds = array<i64: 1, 64>}, {pipeline_mode = #tpu.pipeline_mode<synchronous>, transform_indices = @transform_3, window_bounds = array<i64: 64, 64>}, {pipeline_mode = #tpu.pipeline_mode<synchronous>, transform_indices = @transform_4, window_bounds = array<i64: 1, 64>}, {pipeline_mode = #tpu.pipeline_mode<synchronous>, transform_indices = @transform_5, window_bounds = array<i64: 64, 128>}, {pipeline_mode = #tpu.pipeline_mode<synchronous>, transform_indices = @transform_6, window_bounds = array<i64: 1, 128>}, {transform_indices = @transform_7, window_bounds = array<i64: 2, 128>}]} {
    %c0 = arith.constant 0 : index
    %c0_0 = arith.constant 0 : index
    %0 = vector.load %arg1[%c0, %c0_0] : memref<2x8xf32, #tpu.memory_space<vmem>>, vector<2x8xf32>
    %c0_1 = arith.constant 0 : index
    %c0_2 = arith.constant 0 : index
    %1 = vector.load %arg2[%c0_1, %c0_2] : memref<8x64xf32, #tpu.memory_space<vmem>>, vector<8x64xf32>
    %cst = arith.constant dense<0.000000e+00> : vector<2x64xf32>
    %2 = tpu.matmul %0, %1, %cst {dimension_numbers = #tpu.dot_dimension_numbers<[1], [0], [0], [1], [0, 0, 1, 1], [], []>} : vector<2x8xf32>, vector<8x64xf32>, vector<2x64xf32> -> vector<2x64xf32>
    %c0_3 = arith.constant 0 : index
    %c0_4 = arith.constant 0 : index
    %3 = vector.load %arg3[%c0_3, %c0_4] : memref<1x64xf32, #tpu.memory_space<vmem>>, vector<1x64xf32>
    %4 = vector.broadcast %3 : vector<1x64xf32> to vector<2x64xf32>
    %5 = arith.addf %2, %4 : vector<2x64xf32>
    %cst_5 = arith.constant 0.000000e+00 : f32
    %6 = vector.broadcast %cst_5 : f32 to vector<2x64xf32>
    %7 = arith.maximumf %5, %6 : vector<2x64xf32>
    %c0_6 = arith.constant 0 : index
    %c0_7 = arith.constant 0 : index
    %8 = vector.load %arg4[%c0_6, %c0_7] : memref<64x64xf32, #tpu.memory_space<vmem>>, vector<64x64xf32>
    %cst_8 = arith.constant dense<0.000000e+00> : vector<2x64xf32>
    %9 = tpu.matmul %7, %8, %cst_8 {dimension_numbers = #tpu.dot_dimension_numbers<[1], [0], [0], [1], [0, 0, 1, 1], [], []>} : vector<2x64xf32>, vector<64x64xf32>, vector<2x64xf32> -> vector<2x64xf32>
    %c0_9 = arith.constant 0 : index
    %c0_10 = arith.constant 0 : index
    %10 = vector.load %arg5[%c0_9, %c0_10] : memref<1x64xf32, #tpu.memory_space<vmem>>, vector<1x64xf32>
    %11 = vector.broadcast %10 : vector<1x64xf32> to vector<2x64xf32>
    %12 = arith.addf %9, %11 : vector<2x64xf32>
    %cst_11 = arith.constant 0.000000e+00 : f32
    %13 = vector.broadcast %cst_11 : f32 to vector<2x64xf32>
    %14 = arith.maximumf %12, %13 : vector<2x64xf32>
    %c0_12 = arith.constant 0 : index
    %c0_13 = arith.constant 0 : index
    %15 = vector.load %arg6[%c0_12, %c0_13] : memref<64x128xf32, #tpu.memory_space<vmem>>, vector<64x128xf32>
    %cst_14 = arith.constant dense<0.000000e+00> : vector<2x128xf32>
    %16 = tpu.matmul %14, %15, %cst_14 {dimension_numbers = #tpu.dot_dimension_numbers<[1], [0], [0], [1], [0, 0, 1, 1], [], []>} : vector<2x64xf32>, vector<64x128xf32>, vector<2x128xf32> -> vector<2x128xf32>
    %c0_15 = arith.constant 0 : index
    %c0_16 = arith.constant 0 : index
    %17 = vector.load %arg7[%c0_15, %c0_16] : memref<1x128xf32, #tpu.memory_space<vmem>>, vector<1x128xf32>
    %18 = vector.broadcast %17 : vector<1x128xf32> to vector<2x128xf32>
    %19 = arith.addf %16, %18 : vector<2x128xf32>
    %c0_17 = arith.constant 0 : index
    %c0_18 = arith.constant 0 : index
    %20 = vector.load %arg8[%c0_17, %c0_18] : memref<2x128xf32, #tpu.memory_space<vmem>>, vector<2x128xf32>
    tpu.vector_store %arg8[%c0_17, %c0_18], %19 {strides = array<i32>} : memref<2x128xf32, #tpu.memory_space<vmem>>, vector<2x128xf32>,
    return
  }
  func.func @transform_0(%arg0: i32) -> (i32, i32) {
    %c0_i32 = arith.constant 0 : i32
    %c0_i32_0 = arith.constant 0 : i32
    return %arg0, %c0_i32 : i32, i32
  }
  func.func @transform_1(%arg0: i32) -> (i32, i32) {
    %c0_i32 = arith.constant 0 : i32
    %c0_i32_0 = arith.constant 0 : i32
    %c0_i32_1 = arith.constant 0 : i32
    return %c0_i32, %c0_i32_0 : i32, i32
  }
  func.func @transform_2(%arg0: i32) -> (i32, i32) {
    %c0_i32 = arith.constant 0 : i32
    %c0_i32_0 = arith.constant 0 : i32
    %c0_i32_1 = arith.constant 0 : i32
    return %c0_i32, %c0_i32_0 : i32, i32
  }
  func.func @transform_3(%arg0: i32) -> (i32, i32) {
    %c0_i32 = arith.constant 0 : i32
    %c0_i32_0 = arith.constant 0 : i32
    %c0_i32_1 = arith.constant 0 : i32
    return %c0_i32, %c0_i32_0 : i32, i32
  }
  func.func @transform_4(%arg0: i32) -> (i32, i32) {
    %c0_i32 = arith.constant 0 : i32
    %c0_i32_0 = arith.constant 0 : i32
    %c0_i32_1 = arith.constant 0 : i32
    return %c0_i32, %c0_i32_0 : i32, i32
  }
  func.func @transform_5(%arg0: i32) -> (i32, i32) {
    %c0_i32 = arith.constant 0 : i32
    %c0_i32_0 = arith.constant 0 : i32
    %c0_i32_1 = arith.constant 0 : i32
    return %c0_i32, %c0_i32_0 : i32, i32
  }
  func.func @transform_6(%arg0: i32) -> (i32, i32) {
    %c0_i32 = arith.constant 0 : i32
    %c0_i32_0 = arith.constant 0 : i32
    %c0_i32_1 = arith.constant 0 : i32
    return %c0_i32, %c0_i32_0 : i32, i32
  }
  func.func @transform_7(%arg0: i32) -> (i32, i32) {
    %c0_i32 = arith.constant 0 : i32
    %c0_i32_0 = arith.constant 0 : i32
    return %arg0, %c0_i32 : i32, i32
  }
}

</mosaic_0001>

<llo_original>
// kernel: mlp_forward.1
$region0: #{mlp_forward.1}
  #allocation0 [shape = 'u32[]', space=smem, size = 0x4, offset = 0x4, fixed_abs, tag = 'smem constant byte address 0x4 - core index']
  #allocation1 [shape = 'u32[144,128]{1,0:T(1,128)}', space=vmem, size = 0x12000, scoped, tag = 'internal scratch']
  %s0 = inlined_call_operand.vmem [shape: f32[2,8], index: 0, kind: input, shape index: {}]
  %s1 = inlined_call_operand.vmem [shape: f32[8,64], index: 1, kind: input, shape index: {}]
  %s2 = inlined_call_operand.vmem [shape: f32[1,64], index: 2, kind: input, shape index: {}]
  %s3 = inlined_call_operand.vmem [shape: f32[64,64], index: 3, kind: input, shape index: {}]
  %s4 = inlined_call_operand.vmem [shape: f32[1,64], index: 4, kind: input, shape index: {}]
  %s5 = inlined_call_operand.vmem [shape: f32[64,128], index: 5, kind: input, shape index: {}]
  %s6 = inlined_call_operand.vmem [shape: f32[1,128], index: 6, kind: input, shape index: {}]
  %s7 = inlined_call_operand.hbm [shape: f32[2,128], index: 7, kind: output, shape index: {}]
  %s8 = sld [smem:[#allocation0]]
  $region38: #{mlp_forward.1} parent=0
    _
  %s10 = ssub.s32 1, %s8
  %s11 = scalar_select 0, %s10, %s8
  $region1: #{mlp_forward.1} parent=0
    #allocation2 [shape = 'u8[1024]{0}', space=vmem, size = 0x400, scoped, tag = 'output window, operand 0, single buffered']
    #allocation3 [shape = 's32[1]{0}', space=sflag, size = 0x4, scoped, tag = 'scoped memory for mlp_forward.1']
    %12 = vsyncpa [#allocation3], 0
    // Predicated region
    $region2: #{mlp_forward.1} parent=1 // pred_check
      _
    $region3: #{mlp_forward.1} parent=1 // pred_check_branch
      %14 = sbr.rel (0) target = $region5
    $region4: #{mlp_forward.1} parent=1 // pred_region
      _
    $region5: #{mlp_forward.1} parent=1 // pred_fallthru
      _
    // Predicated region
    $region6: #{mlp_forward.1} parent=1 // pred_check
      _
    $region7: #{mlp_forward.1} parent=1 // pred_check_branch
      %16 = sbr.rel (0) target = $region9
    $region8: #{mlp_forward.1} parent=1 // pred_region
      _
    $region9: #{mlp_forward.1} parent=1 // pred_fallthru
      _
    // Predicated region
    $region10: #{mlp_forward.1} parent=1 // pred_check
      _
    $region11: #{mlp_forward.1} parent=1 // pred_check_branch
      %18 = sbr.rel (0) target = $region13
    $region12: #{mlp_forward.1} parent=1 // pred_region
      _
    $region13: #{mlp_forward.1} parent=1 // pred_fallthru
      _
    // Predicated region
    $region14: #{mlp_forward.1} parent=1 // pred_check
      _
    $region15: #{mlp_forward.1} parent=1 // pred_check_branch
      %20 = sbr.rel (0) target = $region17
    $region16: #{mlp_forward.1} parent=1 // pred_region
      _
    $region17: #{mlp_forward.1} parent=1 // pred_fallthru
      _
    // Predicated region
    $region18: #{mlp_forward.1} parent=1 // pred_check
      _
    $region19: #{mlp_forward.1} parent=1 // pred_check_branch
      %22 = sbr.rel (0) target = $region21
    $region20: #{mlp_forward.1} parent=1 // pred_region
      _
    $region21: #{mlp_forward.1} parent=1 // pred_fallthru
      _
    // Predicated region
    $region22: #{mlp_forward.1} parent=1 // pred_check
      _
    $region23: #{mlp_forward.1} parent=1 // pred_check_branch
      %24 = sbr.rel (0) target = $region25
    $region24: #{mlp_forward.1} parent=1 // pred_region
      _
    $region25: #{mlp_forward.1} parent=1 // pred_fallthru
      _
    // Predicated region
    $region26: #{mlp_forward.1} parent=1 // pred_check
      _
    $region27: #{mlp_forward.1} parent=1 // pred_check_branch
      %26 = sbr.rel (0) target = $region29
    $region28: #{mlp_forward.1} parent=1 // pred_region
      _
    $region29: #{mlp_forward.1} parent=1 // pred_fallthru
      _
    %v27 = vld [vmem:[%s0] sm:$0x3]
    %v28 = vld [vmem:[%s1] sm:$0xff]
    %v29 = vld [vmem:[%s2] sm:$0x1]
    %v31 = vlaneseq
    %v32 = vshrl.u32 %v31, 7
    %v33 = vsub.s32 0, %v32
    %v34 = vrot.slane %v29, %v33
    %vm36 = vcmask 64512
    %v38 = vsel %vm36, %v27, 0
    %40 = vmatprep.subr.mxu0 0.0
    %41 = vmatpush1.msra.mxu0 %v28
    %42 = vmatprep.subr.mxu0 0.0
    %43 = vmatpush1.msra.mxu0 0.0
    %44 = vmatprep.subr.mxu0 0.0
    %45 = vmatpush1.msra.mxu0 0.0
    %46 = vmatprep.subr.mxu0 0.0
    %47 = vmatpush1.msra.mxu0 0.0
    %48 = vmatprep.subr.mxu0 0.0
    %49 = vmatpush1.msra.mxu0 0.0
    %50 = vmatprep.subr.mxu0 0.0
    %51 = vmatpush1.msra.mxu0 0.0
    %52 = vmatprep.subr.mxu0 0.0
    %53 = vmatpush1.msra.mxu0 0.0
    %54 = vmatprep.subr.mxu0 0.0
    %55 = vmatpush1.msra.mxu0 0.0
    %56 = vmatprep.subr.mxu0 0.0
    %57 = vmatpush1.msra.mxu0 0.0
    %58 = vmatprep.subr.mxu0 0.0
    %59 = vmatpush1.msra.mxu0 0.0
    %60 = vmatprep.subr.mxu0 0.0
    %61 = vmatpush1.msra.mxu0 0.0
    %62 = vmatprep.subr.mxu0 0.0
    %63 = vmatpush1.msra.mxu0 0.0
    %64 = vmatprep.subr.mxu0 0.0
    %65 = vmatpush1.msra.mxu0 0.0
    %66 = vmatprep.subr.mxu0 0.0
    %67 = vmatpush1.msra.mxu0 0.0
    %68 = vmatprep.subr.mxu0 0.0
    %69 = vmatpush1.msra.mxu0 0.0
    %70 = vmatprep.subr.mxu0 0.0
    %71 = vmatpush1.msra.mxu0 0.0
    %72 = vmatprep.subr.mxu0 0.0
    %73 = vmatpush1.msra.mxu0 0.0
    %74 = vmatprep.subr.mxu0 0.0
    %75 = vmatpush1.msra.mxu0 0.0
    %76 = vmatprep.subr.mxu0 0.0
    %77 = vmatpush1.msra.mxu0 0.0
    %78 = vmatprep.subr.mxu0 0.0
    %79 = vmatpush1.msra.mxu0 0.0
    %80 = vmatprep.subr.mxu0 0.0
    %81 = vmatpush1.msra.mxu0 0.0
    %82 = vmatprep.subr.mxu0 0.0
    %83 = vmatpush1.msra.mxu0 0.0
    %84 = vmatprep.subr.mxu0 0.0
    %85 = vmatpush1.msra.mxu0 0.0
    %86 = vmatprep.subr.mxu0 0.0
    %87 = vmatpush1.msra.mxu0 0.0
    %88 = vmatprep.subr.mxu0 0.0
    %89 = vmatpush1.msra.mxu0 0.0
    %90 = vmatprep.subr.mxu0 0.0
    %91 = vmatpush1.msra.mxu0 0.0
    %92 = vmatprep.subr.mxu0 0.0
    %93 = vmatpush1.msra.mxu0 0.0
    %94 = vmatprep.subr.mxu0 0.0
    %95 = vmatpush1.msra.mxu0 0.0
    %96 = vmatprep.subr.mxu0 0.0
    %97 = vmatpush1.msra.mxu0 0.0
    %98 = vmatprep.subr.mxu0 0.0
    %99 = vmatpush1.msra.mxu0 0.0
    %100 = vmatprep.subr.mxu0 0.0
    %101 = vmatpush1.msra.mxu0 0.0
    %102 = vmatprep.subr.mxu0 0.0
    %103 = vmatpush1.msra.mxu0 0.0
    %104 = vmatprep.mubr.f32.mxu0 0.0
    %105 = vmatmul.mubr.f32.gmra.mrb[0].mxu0 %v38
    %v106 = vpop.f32.mrb[0].mxu0
    %v107 = vadd.f32 %v34, %v106
    %v108 = vpop.f32.mrb[0].mxu0
    %109 = vdwg.mxu0
    %v110 = vmax.f32 %v107, 0.0
    %v111 = vld [vmem:[%s3] sm:$0xff]
    %v112 = vld [vmem:[%s3 + $0x8] sm:$0xff]
    %v113 = vld [vmem:[%s3 + $0x10] sm:$0xff]
    %v114 = vld [vmem:[%s3 + $0x18] sm:$0xff]
    %v115 = vld [vmem:[%s3 + $0x20] sm:$0xff]
    %v116 = vld [vmem:[%s3 + $0x28] sm:$0xff]
    %v117 = vld [vmem:[%s3 + $0x30] sm:$0xff]
    %v118 = vld [vmem:[%s3 + $0x38] sm:$0xff]
    %v119 = vld [vmem:[%s4] sm:$0x1]
    %v121 = vlaneseq
    %v122 = vshrl.u32 %v121, 7
    %v123 = vsub.s32 0, %v122
    %v124 = vrot.slane %v119, %v123
    %vm126 = vcmask 523264
    %v128 = vsel %vm126, %v110, 0
    %130 = vmatprep.subr.mxu0 0.0
    %131 = vmatpush1.msra.mxu0 %v111
    %132 = vmatprep.subr.mxu0 0.0
    %133 = vmatpush1.msra.mxu0 %v112
    %134 = vmatprep.subr.mxu0 0.0
    %135 = vmatpush1.msra.mxu0 %v113
    %136 = vmatprep.subr.mxu0 0.0
    %137 = vmatpush1.msra.mxu0 %v114
    %138 = vmatprep.subr.mxu0 0.0
    %139 = vmatpush1.msra.mxu0 %v115
    %140 = vmatprep.subr.mxu0 0.0
    %141 = vmatpush1.msra.mxu0 %v116
    %142 = vmatprep.subr.mxu0 0.0
    %143 = vmatpush1.msra.mxu0 %v117
    %144 = vmatprep.subr.mxu0 0.0
    %145 = vmatpush1.msra.mxu0 %v118
    %146 = vmatprep.subr.mxu0 0.0
    %147 = vmatpush1.msra.mxu0 0.0
    %148 = vmatprep.subr.mxu0 0.0
    %149 = vmatpush1.msra.mxu0 0.0
    %150 = vmatprep.subr.mxu0 0.0
    %151 = vmatpush1.msra.mxu0 0.0
    %152 = vmatprep.subr.mxu0 0.0
    %153 = vmatpush1.msra.mxu0 0.0
    %154 = vmatprep.subr.mxu0 0.0
    %155 = vmatpush1.msra.mxu0 0.0
    %156 = vmatprep.subr.mxu0 0.0
    %157 = vmatpush1.msra.mxu0 0.0
    %158 = vmatprep.subr.mxu0 0.0
    %159 = vmatpush1.msra.mxu0 0.0
    %160 = vmatprep.subr.mxu0 0.0
    %161 = vmatpush1.msra.mxu0 0.0
    %162 = vmatprep.subr.mxu0 0.0
    %163 = vmatpush1.msra.mxu0 0.0
    %164 = vmatprep.subr.mxu0 0.0
    %165 = vmatpush1.msra.mxu0 0.0
    %166 = vmatprep.subr.mxu0 0.0
    %167 = vmatpush1.msra.mxu0 0.0
    %168 = vmatprep.subr.mxu0 0.0
    %169 = vmatpush1.msra.mxu0 0.0
    %170 = vmatprep.subr.mxu0 0.0
    %171 = vmatpush1.msra.mxu0 0.0
    %172 = vmatprep.subr.mxu0 0.0
    %173 = vmatpush1.msra.mxu0 0.0
    %174 = vmatprep.subr.mxu0 0.0
    %175 = vmatpush1.msra.mxu0 0.0
    %176 = vmatprep.subr.mxu0 0.0
    %177 = vmatpush1.msra.mxu0 0.0
    %178 = vmatprep.subr.mxu0 0.0
    %179 = vmatpush1.msra.mxu0 0.0
    %180 = vmatprep.subr.mxu0 0.0
    %181 = vmatpush1.msra.mxu0 0.0
    %182 = vmatprep.subr.mxu0 0.0
    %183 = vmatpush1.msra.mxu0 0.0
    %184 = vmatprep.subr.mxu0 0.0
    %185 = vmatpush1.msra.mxu0 0.0
    %186 = vmatprep.subr.mxu0 0.0
    %187 = vmatpush1.msra.mxu0 0.0
    %188 = vmatprep.subr.mxu0 0.0
    %189 = vmatpush1.msra.mxu0 0.0
    %190 = vmatprep.subr.mxu0 0.0
    %191 = vmatpush1.msra.mxu0 0.0
    %192 = vmatprep.subr.mxu0 0.0
    %193 = vmatpush1.msra.mxu0 0.0
    %194 = vmatprep.mubr.f32.mxu0 0.0
    %195 = vmatmul.mubr.f32.gmra.mrb[0].mxu0 %v128
    %v196 = vpop.f32.mrb[0].mxu0
    %v197 = vadd.f32 %v124, %v196
    %v198 = vpop.f32.mrb[0].mxu0
    %199 = vdwg.mxu0
    %v200 = vmax.f32 %v197, 0.0
    %v201 = vld [vmem:[%s5] sm:$0xff]
    %v202 = vld [vmem:[%s5 + $0x8] sm:$0xff]
    %v203 = vld [vmem:[%s5 + $0x10] sm:$0xff]
    %v204 = vld [vmem:[%s5 + $0x18] sm:$0xff]
    %v205 = vld [vmem:[%s5 + $0x20] sm:$0xff]
    %v206 = vld [vmem:[%s5 + $0x28] sm:$0xff]
    %v207 = vld [vmem:[%s5 + $0x30] sm:$0xff]
    %v208 = vld [vmem:[%s5 + $0x38] sm:$0xff]
    %v209 = vld [vmem:[%s6] sm:$0x1]
    %v211 = vlaneseq
    %v212 = vshrl.u32 %v211, 7
    %v213 = vsub.s32 0, %v212
    %v214 = vrot.slane %v209, %v213
    %v217 = vsel %vm126, %v200, 0
    %219 = vmatprep.subr.mxu0 0.0
    %220 = vmatpush1.msra.mxu0 %v201
    %221 = vmatprep.subr.mxu0 0.0
    %222 = vmatpush1.msra.mxu0 %v202
    %223 = vmatprep.subr.mxu0 0.0
    %224 = vmatpush1.msra.mxu0 %v203
    %225 = vmatprep.subr.mxu0 0.0
    %226 = vmatpush1.msra.mxu0 %v204
    %227 = vmatprep.subr.mxu0 0.0
    %228 = vmatpush1.msra.mxu0 %v205
    %229 = vmatprep.subr.mxu0 0.0
    %230 = vmatpush1.msra.mxu0 %v206
    %231 = vmatprep.subr.mxu0 0.0
    %232 = vmatpush1.msra.mxu0 %v207
    %233 = vmatprep.subr.mxu0 0.0
    %234 = vmatpush1.msra.mxu0 %v208
    %235 = vmatprep.subr.mxu0 0.0
    %236 = vmatpush1.msra.mxu0 0.0
    %237 = vmatprep.subr.mxu0 0.0
    %238 = vmatpush1.msra.mxu0 0.0
    %239 = vmatprep.subr.mxu0 0.0
    %240 = vmatpush1.msra.mxu0 0.0
    %241 = vmatprep.subr.mxu0 0.0
    %242 = vmatpush1.msra.mxu0 0.0
    %243 = vmatprep.subr.mxu0 0.0
    %244 = vmatpush1.msra.mxu0 0.0
    %245 = vmatprep.subr.mxu0 0.0
    %246 = vmatpush1.msra.mxu0 0.0
    %247 = vmatprep.subr.mxu0 0.0
    %248 = vmatpush1.msra.mxu0 0.0
    %249 = vmatprep.subr.mxu0 0.0
    %250 = vmatpush1.msra.mxu0 0.0
    %251 = vmatprep.subr.mxu0 0.0
    %252 = vmatpush1.msra.mxu0 0.0
    %253 = vmatprep.subr.mxu0 0.0
    %254 = vmatpush1.msra.mxu0 0.0
    %255 = vmatprep.subr.mxu0 0.0
    %256 = vmatpush1.msra.mxu0 0.0
    %257 = vmatprep.subr.mxu0 0.0
    %258 = vmatpush1.msra.mxu0 0.0
    %259 = vmatprep.subr.mxu0 0.0
    %260 = vmatpush1.msra.mxu0 0.0
    %261 = vmatprep.subr.mxu0 0.0
    %262 = vmatpush1.msra.mxu0 0.0
    %263 = vmatprep.subr.mxu0 0.0
    %264 = vmatpush1.msra.mxu0 0.0
    %265 = vmatprep.subr.mxu0 0.0
    %266 = vmatpush1.msra.mxu0 0.0
    %267 = vmatprep.subr.mxu0 0.0
    %268 = vmatpush1.msra.mxu0 0.0
    %269 = vmatprep.subr.mxu0 0.0
    %270 = vmatpush1.msra.mxu0 0.0
    %271 = vmatprep.subr.mxu0 0.0
    %272 = vmatpush1.msra.mxu0 0.0
    %273 = vmatprep.subr.mxu0 0.0
    %274 = vmatpush1.msra.mxu0 0.0
    %275 = vmatprep.subr.mxu0 0.0
    %276 = vmatpush1.msra.mxu0 0.0
    %277 = vmatprep.subr.mxu0 0.0
    %278 = vmatpush1.msra.mxu0 0.0
    %279 = vmatprep.subr.mxu0 0.0
    %280 = vmatpush1.msra.mxu0 0.0
    %281 = vmatprep.subr.mxu0 0.0
    %282 = vmatpush1.msra.mxu0 0.0
    %283 = vmatprep.mubr.f32.mxu0 0.0
    %284 = vmatmul.mubr.f32.gmra.mrb[0].mxu0 %v217
    %v285 = vpop.f32.mrb[0].mxu0
    %v286 = vadd.f32 %v214, %v285
    %v287 = vpop.f32.mrb[0].mxu0
    %288 = vdwg.mxu0
    %289 = vst [vmem:[#allocation2] sm:$0x3] %v286
    // Predicated region
    $region30: #{mlp_forward.1} parent=1 // pred_check
      _
    $region31: #{mlp_forward.1} parent=1 // pred_check_branch
      %291 = sbr.rel (0) target = $region33
    $region32: #{mlp_forward.1} parent=1 // pred_region
      %s293 = ssub.s32 32, 32
      %294 = vsyncadd [#allocation3], %s293
      %s296 = sshll.u32 [#allocation2], 4
      %s297 = int_to_ptr.vmem [resolvable:$true] %s296
      %299 = dma.vmem_to_hbm [thread:$0]  %s297, 32, %s7, [#allocation3]
    $region33: #{mlp_forward.1} parent=1 // pred_fallthru
      _
    // Predicated region
    $region34: #{mlp_forward.1} parent=1 // pred_check
      _
    $region35: #{mlp_forward.1} parent=1 // pred_check_branch
      %301 = sbr.rel (0) target = $region37
    $region36: #{mlp_forward.1} parent=1 // pred_region
      %302 = dma.done [#allocation3], 32
    $region37: #{mlp_forward.1} parent=1 // pred_fallthru
      _
    %303 = vsyncpa [#allocation3], 1

</llo_original>
